<compile_context>
chip_gen: v7x
topology: tpu7x:2x2x1
jax: 0.10.0
libtpu: 0.0.40
codegen_flags: <defaults>
</compile_context>

<pallas_src>
import functools

import jax
import jax.numpy as jnp
from jax.experimental import pallas as pl
from jax.experimental.pallas import tpu as pltpu


OFFSET_LANES = 128  # 18 real offset channels padded to a lane-dense 128-wide tensor
_VMEM_LIMIT = 64 * 1024 * 1024


def _pick_tile(n, cap):
    """Largest multiple of 8 that divides n and is <= cap (falls back to n)."""
    t = min(cap, n)
    t -= t % 8
    while t >= 8:
        if n % t == 0:
            return t
        t -= 8
    return n


# ---------------------------------------------------------------------------
# 1x1 conv + folded-BN affine (+ optional ReLU), tiled over (batch, HW tiles)
# ---------------------------------------------------------------------------
def _matmul_affine_kernel(apply_relu, x_ref, w_ref, s_ref, b_ref, o_ref):
    y = jnp.dot(x_ref[0], w_ref[...], preferred_element_type=jnp.float32)
    y = y * s_ref[...] + b_ref[...]
    if apply_relu:
        y = jnp.maximum(y, 0.0)
    o_ref[0] = y.astype(o_ref.dtype)


def matmul_affine(x, w, scale, bias, *, relu, out_dtype=jnp.bfloat16, tile_cap=512):
    N, M, Cin = x.shape
    Cout = w.shape[1]
    TM = _pick_tile(M, tile_cap)
    return pl.pallas_call(
        functools.partial(_matmul_affine_kernel, relu),
        out_shape=jax.ShapeDtypeStruct((N, M, Cout), out_dtype),
        grid_spec=pltpu.PrefetchScalarGridSpec(
            num_scalar_prefetch=0,
            grid=(N, M // TM),
            in_specs=[
                pl.BlockSpec((1, TM, Cin), lambda b, m: (b, m, 0)),
                pl.BlockSpec((Cin, Cout), lambda b, m: (0, 0)),
                pl.BlockSpec((1, Cout), lambda b, m: (0, 0)),
                pl.BlockSpec((1, Cout), lambda b, m: (0, 0)),
            ],
            out_specs=pl.BlockSpec((1, TM, Cout), lambda b, m: (b, m, 0)),
        ),
        compiler_params=pltpu.CompilerParams(
            dimension_semantics=("parallel", "parallel"),
            vmem_limit_bytes=_VMEM_LIMIT),
    )(x, w, scale, bias)


# ---------------------------------------------------------------------------
# conv2_offset: standard 3x3 conv (pad=1) via 9 flat-shifted slices of the
# zero-padded, flattened feature map — no im2col tensor in HBM.
# Output is in padded-pixel coordinates ((H+2)*(W+2) rows); the interior is
# sliced out in glue.  Output lanes: 0..8 = dy per tap, 9..17 = dx per tap.
# ---------------------------------------------------------------------------
def _offset_conv_kernel(P, W2, Cb, xpad_ref, w_ref, b_ref, o_ref):
    # xpad_ref: (1, L, Cb) with L = P + 2*(W2+1) guard rows (all-zero padding).
    xp = xpad_ref[0].astype(jnp.float32)            # (L, Cb)
    head = W2 + 1
    acc = jnp.zeros((P, o_ref.shape[-1]), jnp.float32)
    for k in range(9):
        ky, kx = divmod(k, 3)
        s = head + (ky - 1) * W2 + (kx - 1)         # static flat shift for this tap
        patch = xp[s:s + P, :]                      # (P, Cb)
        acc = acc + jnp.dot(patch, w_ref[k * Cb:(k + 1) * Cb, :],
                            preferred_element_type=jnp.float32)
    o_ref[0] = acc + b_ref[...]


def offset_conv3x3(xpad_flat, w_off, b_off, *, H, W):
    N, L, Cb = xpad_flat.shape
    W2 = W + 2
    P = (H + 2) * W2
    Coff = w_off.shape[1]
    return pl.pallas_call(
        functools.partial(_offset_conv_kernel, P, W2, Cb),
        out_shape=jax.ShapeDtypeStruct((N, P, Coff), jnp.float32),
        grid_spec=pltpu.PrefetchScalarGridSpec(
            num_scalar_prefetch=0,
            grid=(N,),
            in_specs=[
                pl.BlockSpec((1, L, Cb), lambda b: (b, 0, 0)),
                pl.BlockSpec((9 * Cb, Coff), lambda b: (0, 0)),
                pl.BlockSpec((1, Coff), lambda b: (0, 0)),
            ],
            out_specs=pl.BlockSpec((1, P, Coff), lambda b: (b, 0, 0)),
        ),
        compiler_params=pltpu.CompilerParams(
            dimension_semantics=("parallel",),
            vmem_limit_bytes=_VMEM_LIMIT),
    )(xpad_flat, w_off, b_off)


# ---------------------------------------------------------------------------
# Deformable 3x3 conv (stride=1) + folded BN + ReLU, tiled over query rows.
# One combined weighted gather matrix per tap; -1 sentinel handles zero padding.
# ---------------------------------------------------------------------------
def _deform_conv_kernel(H, W, Cb, TQ, feat_ref, off_ref, w_ref, s_ref, b_ref, o_ref):
    HW = H * W
    Cout = o_ref.shape[-1]
    feat = feat_ref[0]                               # (HW, Cb) bf16 (full map)
    off = off_ref[0]                                 # (TQ, 128) f32

    row0 = pl.program_id(1) * TQ
    row = row0 + jax.lax.broadcasted_iota(jnp.int32, (TQ, 1), 0)
    oy = (row // W).astype(jnp.float32)              # (TQ, 1)
    ox = (row % W).astype(jnp.float32)
    col = jax.lax.broadcasted_iota(jnp.int32, (TQ, HW), 1)

    # Per-tap kernel-grid displacements, generated in-kernel (no captured consts):
    # tap k = 3*ky + kx with ky,kx in {0,1,2}; displacement = (ky-1, kx-1).
    tap = jax.lax.broadcasted_iota(jnp.int32, (1, 9), 1)
    ky = (tap // 3 - 1).astype(jnp.float32)          # (1, 9)
    kx = (tap % 3 - 1).astype(jnp.float32)           # (1, 9)

    py = oy + ky + off[:, 0:9]                       # (TQ, 9) absolute sample y
    px = ox + kx + off[:, 9:18]                      # (TQ, 9) absolute sample x

    y0f = jnp.floor(py)
    x0f = jnp.floor(px)
    ly = py - y0f
    lx = px - x0f
    hy = 1.0 - ly
    hx = 1.0 - lx
    y0 = y0f.astype(jnp.int32)
    x0 = x0f.astype(jnp.int32)
    y1 = y0 + 1
    x1 = x0 + 1

    def flat_idx(yy, xx):
        valid = (yy >= 0) & (yy < H) & (xx >= 0) & (xx < W)
        return jnp.where(valid, yy * W + xx, -1)     # -1 never matches `col` -> zero sample

    i00 = flat_idx(y0, x0)
    i01 = flat_idx(y0, x1)
    i10 = flat_idx(y1, x0)
    i11 = flat_idx(y1, x1)
    w00 = hy * hx
    w01 = hy * lx
    w10 = ly * hx
    w11 = ly * lx                                    # (TQ, 9) f32 bilinear weights

    acc = jnp.zeros((TQ, Cout), jnp.float32)
    # Static unroll over the 9 taps: each combined gather matrix is consumed
    # immediately by its matmul so live ranges stay bounded; a fori_loop would
    # force dynamic lane-slicing of the per-tap offset columns.
    for k in range(9):
        g = (jnp.where(col == i00[:, k:k + 1], w00[:, k:k + 1], 0.0)
             + jnp.where(col == i01[:, k:k + 1], w01[:, k:k + 1], 0.0)
             + jnp.where(col == i10[:, k:k + 1], w10[:, k:k + 1], 0.0)
             + jnp.where(col == i11[:, k:k + 1], w11[:, k:k + 1], 0.0))   # (TQ, HW)
        sampled = jnp.dot(g.astype(jnp.bfloat16), feat,
                          preferred_element_type=jnp.float32)             # (TQ, Cb)
        acc = acc + jnp.dot(sampled.astype(jnp.bfloat16),
                            w_ref[k * Cb:(k + 1) * Cb, :],
                            preferred_element_type=jnp.float32)
    y = acc * s_ref[...] + b_ref[...]
    o_ref[0] = jnp.maximum(y, 0.0).astype(o_ref.dtype)


def deform_conv_bn_relu(feat, offsets, w, scale, bias, *, H, W, tq_cap=128):
    N, HW, Cb = feat.shape
    Coff = offsets.shape[-1]
    Cout = w.shape[1]
    TQ = _pick_tile(HW, tq_cap)
    flops = int(N * 9 * (2 * HW * HW * Cb + 2 * HW * Cb * Cout))
    bytes_accessed = int(N * (HW * Cb * 2 + HW * Coff * 4 + HW * Cout * 2)
                         + 9 * Cb * Cout * 2)
    return pl.pallas_call(
        functools.partial(_deform_conv_kernel, H, W, Cb, TQ),
        out_shape=jax.ShapeDtypeStruct((N, HW, Cout), jnp.bfloat16),
        grid_spec=pltpu.PrefetchScalarGridSpec(
            num_scalar_prefetch=0,
            grid=(N, HW // TQ),
            in_specs=[
                # full feature map per batch (samples can land anywhere)
                pl.BlockSpec((1, HW, Cb), lambda b, q: (b, 0, 0)),
                pl.BlockSpec((1, TQ, Coff), lambda b, q: (b, q, 0)),
                pl.BlockSpec((9 * Cb, Cout), lambda b, q: (0, 0)),
                pl.BlockSpec((1, Cout), lambda b, q: (0, 0)),
                pl.BlockSpec((1, Cout), lambda b, q: (0, 0)),
            ],
            out_specs=pl.BlockSpec((1, TQ, Cout), lambda b, q: (b, q, 0)),
        ),
        compiler_params=pltpu.CompilerParams(
            dimension_semantics=("parallel", "parallel"),
            vmem_limit_bytes=_VMEM_LIMIT),
        cost_estimate=pl.CostEstimate(flops=flops, transcendentals=0,
                                      bytes_accessed=bytes_accessed),
    )(feat, offsets, w, scale, bias)


# ---------------------------------------------------------------------------
# conv3 (1x1) + BN, shortcut (1x1) + BN, residual add, final ReLU (fused)
# ---------------------------------------------------------------------------
def _conv3_shortcut_kernel(f_ref, x_ref, w3_ref, s3_ref, b3_ref,
                           wsc_ref, ssc_ref, bsc_ref, o_ref):
    y = jnp.dot(f_ref[0], w3_ref[...], preferred_element_type=jnp.float32)
    y = y * s3_ref[...] + b3_ref[...]
    sc = jnp.dot(x_ref[0], wsc_ref[...], preferred_element_type=jnp.float32)
    sc = sc * ssc_ref[...] + bsc_ref[...]
    o_ref[0] = jnp.maximum(y + sc, 0.0).astype(o_ref.dtype)


def conv3_plus_shortcut(feat, x, w3, s3, b3, wsc, ssc, bsc, *, tile_cap=512):
    N, HW, Cb = feat.shape
    Cin = x.shape[-1]
    Cout = w3.shape[1]
    TM = _pick_tile(HW, tile_cap)
    return pl.pallas_call(
        _conv3_shortcut_kernel,
        out_shape=jax.ShapeDtypeStruct((N, HW, Cout), jnp.float32),
        grid_spec=pltpu.PrefetchScalarGridSpec(
            num_scalar_prefetch=0,
            grid=(N, HW // TM),
            in_specs=[
                pl.BlockSpec((1, TM, Cb), lambda b, m: (b, m, 0)),
                pl.BlockSpec((1, TM, Cin), lambda b, m: (b, m, 0)),
                pl.BlockSpec((Cb, Cout), lambda b, m: (0, 0)),
                pl.BlockSpec((1, Cout), lambda b, m: (0, 0)),
                pl.BlockSpec((1, Cout), lambda b, m: (0, 0)),
                pl.BlockSpec((Cin, Cout), lambda b, m: (0, 0)),
                pl.BlockSpec((1, Cout), lambda b, m: (0, 0)),
                pl.BlockSpec((1, Cout), lambda b, m: (0, 0)),
            ],
            out_specs=pl.BlockSpec((1, TM, Cout), lambda b, m: (b, m, 0)),
        ),
        compiler_params=pltpu.CompilerParams(
            dimension_semantics=("parallel", "parallel"),
            vmem_limit_bytes=_VMEM_LIMIT),
    )(feat, x, w3, s3, b3, wsc, ssc, bsc)


# ---------------------------------------------------------------------------
# Parameter init (deterministic, shapes match the module's __init__)
# ---------------------------------------------------------------------------
def _msra(key, shape, fan_out, dtype=jnp.bfloat16):
    # c2_msra_fill: kaiming_normal, mode="fan_out", relu gain
    return (jax.random.normal(key, shape) * jnp.sqrt(2.0 / fan_out)).astype(dtype)


def _bn_affine(key, c):
    # inference-mode BN folded to per-channel scale/bias
    k1, k2 = jax.random.split(key)
    gamma = 1.0 + 0.1 * jax.random.normal(k1, (c,))
    beta = 0.1 * jax.random.normal(k2, (c,))
    mean = jnp.zeros((c,))
    var = jnp.ones((c,))
    eps = 1e-5
    scale = gamma / jnp.sqrt(var + eps)
    bias = beta - mean * scale
    return (scale.reshape(1, c).astype(jnp.float32),
            bias.reshape(1, c).astype(jnp.float32))


def init_params(key, in_ch, out_ch, bott_ch):
    ks = jax.random.split(key, 10)
    p = {}
    # conv1: 1x1 -> matrix (in, bott), bf16 MXU weights
    p["w1"] = _msra(ks[0], (in_ch, bott_ch), fan_out=bott_ch)
    p["s1"], p["b1"] = _bn_affine(ks[1], bott_ch)
    # conv2_offset: 3x3 -> matrix (9*Cb, 128); cols 0..8 = dy per tap, 9..17 = dx
    # per tap, rest zero (lane-dense output).  The reference zero-initializes this
    # conv; small random values are used so the deformable path is exercised.
    w_off = jnp.zeros((9 * bott_ch, OFFSET_LANES), jnp.float32)
    w_off = w_off.at[:, :18].set(0.1 * jax.random.normal(ks[2], (9 * bott_ch, 18)))
    p["w_off"] = w_off
    b_off = jnp.zeros((1, OFFSET_LANES), jnp.float32)
    b_off = b_off.at[:, :18].set(0.1 * jax.random.normal(ks[3], (1, 18)))
    p["b_off"] = b_off
    # conv2 (deformable 3x3): matrix (9*Cb, Cb), row order [tap*Cb + ci]
    p["w2"] = _msra(ks[4], (9 * bott_ch, bott_ch), fan_out=bott_ch * 9)
    p["s2"], p["b2"] = _bn_affine(ks[5], bott_ch)
    # conv3: 1x1 -> matrix (bott, out)
    p["w3"] = _msra(ks[6], (bott_ch, out_ch), fan_out=out_ch)
    p["s3"], p["b3"] = _bn_affine(ks[7], out_ch)
    # shortcut: 1x1 -> matrix (in, out)
    p["wsc"] = _msra(ks[8], (in_ch, out_ch), fan_out=out_ch)
    p["ssc"], p["bsc"] = _bn_affine(ks[9], out_ch)
    return p


# ---------------------------------------------------------------------------
# Full block forward (glue in plain JAX, hot paths in Pallas kernels)
# ---------------------------------------------------------------------------
def deform_bottleneck_forward(x_nchw, params):
    N, Cin, H, W = x_nchw.shape
    HW = H * W
    x = jnp.transpose(x_nchw, (0, 2, 3, 1)).reshape(N, HW, Cin).astype(jnp.bfloat16)

    # conv1 (1x1) + BN + ReLU  -> bf16 intermediate
    out = matmul_affine(x, params["w1"], params["s1"], params["b1"], relu=True)
    Cb = params["w1"].shape[1]

    # conv2_offset (3x3, pad=1): zero-pad + flatten once (no 9x im2col in HBM);
    # computed in padded-pixel coordinates, interior sliced out afterwards.
    W2, H2 = W + 2, H + 2
    xpad = jnp.pad(out.reshape(N, H, W, Cb), ((0, 0), (1, 1), (1, 1), (0, 0)))
    xpad = xpad.reshape(N, H2 * W2, Cb)
    xpad = jnp.pad(xpad, ((0, 0), (W2 + 1, W2 + 1), (0, 0)))   # guard rows for flat shifts
    off_full = offset_conv3x3(xpad, params["w_off"], params["b_off"], H=H, W=W)
    offsets = off_full.reshape(N, H2, W2, OFFSET_LANES)[:, 1:H + 1, 1:W + 1, :]
    offsets = offsets.reshape(N, HW, OFFSET_LANES)

    # deformable conv2 (3x3) + BN + ReLU (query-tiled, fused bilinear sampling)
    out = deform_conv_bn_relu(out, offsets, params["w2"], params["s2"], params["b2"],
                              H=H, W=W)

    # conv3 (1x1) + BN, shortcut (1x1) + BN, residual add, ReLU (fused kernel)
    out = conv3_plus_shortcut(out, x, params["w3"], params["s3"], params["b3"],
                              params["wsc"], params["ssc"], params["bsc"])

    Cout = params["w3"].shape[1]
    return jnp.transpose(out.reshape(N, H, W, Cout), (0, 3, 1, 2))   # back to NCHW


if __name__ == "__main__":
    key = jax.random.PRNGKey(0)
    kx, kp = jax.random.split(key)

    N, in_ch, out_ch, bott_ch, H, W = 2, 16, 32, 8, 16, 16
    x = jax.random.normal(kx, (N, in_ch, H, W), dtype=jnp.float32)   # NCHW like PyTorch
    params = init_params(kp, in_ch, out_ch, bott_ch)

    y = deform_bottleneck_forward(x, params)
    y = jax.block_until_ready(y)

    assert y.shape == (N, out_ch, H, W), y.shape
    assert bool(jnp.all(jnp.isfinite(y)))
    assert bool(jnp.all(y >= 0.0))  # final ReLU
    print("KERNEL_OK")
</pallas_src>

<mosaic_0001>
module attributes {stable_mosaic.version = 11 : i64} {
  func.func @_matmul_affine_kernel(%arg0: i32, %arg1: i32, %arg2: memref<1x256x16xbf16, #tpu.memory_space<vmem>>, %arg3: memref<16x8xbf16, #tpu.memory_space<vmem>>, %arg4: memref<1x8xf32, #tpu.memory_space<vmem>>, %arg5: memref<1x8xf32, #tpu.memory_space<vmem>>, %arg6: memref<1x256x8xbf16, #tpu.memory_space<vmem>>) attributes {dimension_semantics = [#tpu.dimension_semantics<parallel>, #tpu.dimension_semantics<parallel>], iteration_bounds = array<i64: 2, 1>, scalar_prefetch = 0 : i64, scratch_operands = 0 : i64, tpu.core_type = #tpu.core_type<tc>, window_params = [{transform_indices = @transform_0, window_bounds = array<i64: 1, 256, 16>}, {pipeline_mode = #tpu.pipeline_mode<synchronous>, transform_indices = @transform_1, window_bounds = array<i64: 16, 8>}, {pipeline_mode = #tpu.pipeline_mode<synchronous>, transform_indices = @transform_2, window_bounds = array<i64: 1, 8>}, {pipeline_mode = #tpu.pipeline_mode<synchronous>, transform_indices = @transform_3, window_bounds = array<i64: 1, 8>}, {transform_indices = @transform_4, window_bounds = array<i64: 1, 256, 8>}]} {
    %c0 = arith.constant 0 : index
    %c0_0 = arith.constant 0 : index
    %c0_1 = arith.constant 0 : index
    %0 = vector.load %arg2[%c0, %c0_0, %c0_1] : memref<1x256x16xbf16, #tpu.memory_space<vmem>>, vector<1x256x16xbf16>
    %1 = vector.shape_cast %0 : vector<1x256x16xbf16> to vector<256x16xbf16>
    %c0_2 = arith.constant 0 : index
    %c0_3 = arith.constant 0 : index
    %2 = vector.load %arg3[%c0_2, %c0_3] : memref<16x8xbf16, #tpu.memory_space<vmem>>, vector<16x8xbf16>
    %cst = arith.constant dense<0.000000e+00> : vector<256x8xf32>
    %3 = tpu.matmul %1, %2, %cst {dimension_numbers = #tpu.dot_dimension_numbers<[1], [0], [0], [1], [0, 0, 1, 1], [], []>} : vector<256x16xbf16>, vector<16x8xbf16>, vector<256x8xf32> -> vector<256x8xf32>
    %c0_4 = arith.constant 0 : index
    %c0_5 = arith.constant 0 : index
    %4 = vector.load %arg4[%c0_4, %c0_5] : memref<1x8xf32, #tpu.memory_space<vmem>>, vector<1x8xf32>
    %5 = vector.broadcast %4 : vector<1x8xf32> to vector<256x8xf32>
    %6 = arith.mulf %3, %5 : vector<256x8xf32>
    %c0_6 = arith.constant 0 : index
    %c0_7 = arith.constant 0 : index
    %7 = vector.load %arg5[%c0_6, %c0_7] : memref<1x8xf32, #tpu.memory_space<vmem>>, vector<1x8xf32>
    %8 = vector.broadcast %7 : vector<1x8xf32> to vector<256x8xf32>
    %9 = arith.addf %6, %8 : vector<256x8xf32>
    %cst_8 = arith.constant 0.000000e+00 : f32
    %10 = vector.broadcast %cst_8 : f32 to vector<256x8xf32>
    %11 = arith.maximumf %9, %10 : vector<256x8xf32>
    %12 = arith.truncf %11 : vector<256x8xf32> to vector<256x8xbf16>
    %c0_9 = arith.constant 0 : index
    %c0_10 = arith.constant 0 : index
    %c0_11 = arith.constant 0 : index
    %13 = vector.load %arg6[%c0_9, %c0_10, %c0_11] : memref<1x256x8xbf16, #tpu.memory_space<vmem>>, vector<1x256x8xbf16>
    %14 = vector.shape_cast %13 : vector<1x256x8xbf16> to vector<256x8xbf16>
    %15 = vector.shape_cast %12 : vector<256x8xbf16> to vector<1x256x8xbf16>
    tpu.vector_store %arg6[%c0_9, %c0_10, %c0_11], %15 {strides = array<i32>} : memref<1x256x8xbf16, #tpu.memory_space<vmem>>, vector<1x256x8xbf16>,
    return
  }
  func.func @transform_0(%arg0: i32, %arg1: i32) -> (i32, i32, i32) {
    %c0_i32 = arith.constant 0 : i32
    %c0_i32_0 = arith.constant 0 : i32
    return %arg0, %arg1, %c0_i32 : i32, i32, i32
  }
  func.func @transform_1(%arg0: i32, %arg1: i32) -> (i32, i32) {
    %c0_i32 = arith.constant 0 : i32
    %c0_i32_0 = arith.constant 0 : i32
    %c0_i32_1 = arith.constant 0 : i32
    return %c0_i32, %c0_i32_0 : i32, i32
  }
  func.func @transform_2(%arg0: i32, %arg1: i32) -> (i32, i32) {
    %c0_i32 = arith.constant 0 : i32
    %c0_i32_0 = arith.constant 0 : i32
    %c0_i32_1 = arith.constant 0 : i32
    return %c0_i32, %c0_i32_0 : i32, i32
  }
  func.func @transform_3(%arg0: i32, %arg1: i32) -> (i32, i32) {
    %c0_i32 = arith.constant 0 : i32
    %c0_i32_0 = arith.constant 0 : i32
    %c0_i32_1 = arith.constant 0 : i32
    return %c0_i32, %c0_i32_0 : i32, i32
  }
  func.func @transform_4(%arg0: i32, %arg1: i32) -> (i32, i32, i32) {
    %c0_i32 = arith.constant 0 : i32
    %c0_i32_0 = arith.constant 0 : i32
    return %arg0, %arg1, %c0_i32 : i32, i32, i32
  }
}

</mosaic_0001>

<llo_original>
// kernel: tpu_custom_call.1
$region0: #{tpu_custom_call.1}
  #allocation0 [shape = 'u32[]', space=smem, size = 0x4, offset = 0x4, fixed_abs, tag = 'smem constant byte address 0x4 - core index']
  #allocation1 [shape = 'u32[144,128]{1,0:T(1,128)}', space=vmem, size = 0x12000, scoped, tag = 'internal scratch']
  %s0 = inlined_call_operand.hbm [shape: bf16[2,256,16], index: 0, kind: input, shape index: {}]
  %s1 = inlined_call_operand.hbm [shape: bf16[16,8], index: 1, kind: input, shape index: {}]
  %s2 = inlined_call_operand.hbm [shape: f32[1,8], index: 2, kind: input, shape index: {}]
  %s3 = inlined_call_operand.hbm [shape: f32[1,8], index: 3, kind: input, shape index: {}]
  %s4 = inlined_call_operand.hbm [shape: bf16[2,256,8], index: 4, kind: output, shape index: {}]
  %s5 = sld [smem:[#allocation0]]
  $region65: #{tpu_custom_call.1} parent=0
    _
  %s7 = ssub.s32 1, %s5
  %s8 = scalar_select 0, %s7, %s5
  $region1: #{tpu_custom_call.1} parent=0
    #allocation2 [shape = 'u8[131072]{0}', space=vmem, size = 0x20000, scoped, tag = 'input window, operand 0']
    #allocation3 [shape = 's32[2]{0}', space=sflag, size = 0x8, scoped, tag = 'scoped memory for tpu_custom_call.1']
    #allocation4 [shape = 's32[2]{0}', space=sflag, size = 0x8, scoped, tag = 'scoped memory for tpu_custom_call.1']
    #allocation5 [shape = 'u8[4096]{0}', space=vmem, size = 0x1000, scoped, tag = 'input window, operand 1, single buffered']
    #allocation6 [shape = 's32[1]{0}', space=sflag, size = 0x4, scoped, tag = 'scoped memory for tpu_custom_call.1']
    #allocation7 [shape = 'u8[512]{0}', space=vmem, size = 0x400, scoped, tag = 'input window, operand 2, single buffered']
    #allocation8 [shape = 'u8[512]{0}', space=vmem, size = 0x400, scoped, tag = 'input window, operand 3, single buffered']
    #allocation9 [shape = 's32[1]{0}', space=sflag, size = 0x4, scoped, tag = 'scoped memory for tpu_custom_call.1']
    #allocation10 [shape = 'u8[131072]{0}', space=vmem, size = 0x20000, scoped, tag = 'output window, operand 0']
    %9 = vsyncpa [#allocation3], 0
    %s10 = scalar_lea.sflag [#allocation3], 1
    %11 = vsyncpa %s10, 0
    %12 = vsyncpa [#allocation6], 0
    %13 = vsyncpa [#allocation9], 0
    %14 = vsyncpa [#allocation4], 0
    %s15 = scalar_lea.sflag [#allocation4], 1
    %16 = vsyncpa %s15, 0
    loop: start=0, step=1, limit=4
    $region2: #{tpu_custom_call.1} parent=1 // loop_pre_header
      _
    $region3: #{tpu_custom_call.1} parent=1 // loop_header
      %s18 = sphi 0, %s22
      %p19 = scmp.ge.s32.totalorder %s18, 4
      %s25 = sphi 0, %s37
      %s26 = sphi 0, %s33
      %s27 = sphi 0, %s25
      %s28 = sphi 0, %s26
      %s29 = sphi 0, %s27
      %s30 = sphi 0, %s28
      %s42 = sphi 0, %s44
      %s45 = sphi 0, %s42
      %s46 = sphi 0, %s45
      %s62 = sphi 0, %s46
      %s66 = sphi 0, %s66
      %s68 = sphi 0, %s66
      %s69 = sphi 0, %s68
      %s83 = sphi 0, %s69
      %s87 = sphi 0, %s87
      %s89 = sphi 0, %s87
      %s90 = sphi 0, %s89
      %s104 = sphi 0, %s90
      %s108 = sphi 0, %s108
      %s110 = sphi 0, %s108
      %s111 = sphi 0, %s110
      %s125 = sphi 0, %s111
      %s133 = sphi 0, %s135
      %s136 = sphi 0, %s133
      %s137 = sphi 0, %s136
      %s153 = sphi 0, %s137
    $region4: #{tpu_custom_call.1} parent=1 // loop_header_branch
      %21 = sbr.rel (%p19) target = $region8
    $region5: #{tpu_custom_call.1} parent=1 // loop_body
      %s23 = ssub.s32 %s18, 1
      %s24 = ssub.s32 %s18, 2
      %s31 = sadd.s32 1, %s26
      %p32 = scmp.ge.s32.totalorder %s31, 1
      %s33 = scalar_select %p32, 0, %s31
      %s34 = sadd.s32 1, %s25
      %s35 = scalar_select %p32, %s34, %s25
      %p36 = scmp.ge.s32.totalorder %s35, 2
      %s37 = scalar_select %p36, 0, %s35
      %s38 = ssub.s32 %s25, %s37
      %s39 = ssub.s32 %s26, %s33
      %s40 = sor.u32 %s38, %s39
      %p41 = scmp.eq.s32.totalorder %s40, 0
      %s43 = sadd.s32 %s42, 1
      %s44 = scalar_select %p41, %s42, %s43
      %p47 = pneg %p41
      %p48 = scmp.eq.s32.totalorder %s18, 1
      %p49 = por %p47, %p48
      %p50 = scmp.ne.s32.totalorder %s42, %s45
      %p51 = scmp.eq.s32.totalorder %s18, 0
      %p52 = por %p50, %p51
      %p53 = scmp.ne.s32.totalorder %s42, %s45
      %p54 = scmp.eq.s32.totalorder %s23, 1
      %p55 = por %p53, %p54
      %p56 = scmp.ne.s32.totalorder %s45, %s46
      %p57 = scmp.eq.s32.totalorder %s23, 0
      %p58 = por %p56, %p57
      %p59 = scmp.ne.s32.totalorder %s45, %s46
      %p60 = scmp.eq.s32.totalorder %s24, 1
      %p61 = por %p59, %p60
      %p63 = scmp.ne.s32.totalorder %s46, %s62
      %p64 = scmp.eq.s32.totalorder %s24, 0
      %p65 = por %p63, %p64
      %s67 = sadd.s32 %s66, 1
      %p70 = scmp.eq.s32.totalorder %s18, 1
      %p71 = scmp.ne.s32.totalorder %s66, %s68
      %p72 = scmp.eq.s32.totalorder %s18, 0
      %p73 = por %p71, %p72
      %p74 = scmp.ne.s32.totalorder %s66, %s68
      %p75 = scmp.eq.s32.totalorder %s23, 1
      %p76 = por %p74, %p75
      %p77 = scmp.ne.s32.totalorder %s68, %s69
      %p78 = scmp.eq.s32.totalorder %s23, 0
      %p79 = por %p77, %p78
      %p80 = scmp.ne.s32.totalorder %s68, %s69
      %p81 = scmp.eq.s32.totalorder %s24, 1
      %p82 = por %p80, %p81
      %p84 = scmp.ne.s32.totalorder %s69, %s83
      %p85 = scmp.eq.s32.totalorder %s24, 0
      %p86 = por %p84, %p85
      %s88 = sadd.s32 %s87, 1
      %p91 = scmp.eq.s32.totalorder %s18, 1
      %p92 = scmp.ne.s32.totalorder %s87, %s89
      %p93 = scmp.eq.s32.totalorder %s18, 0
      %p94 = por %p92, %p93
      %p95 = scmp.ne.s32.totalorder %s87, %s89
      %p96 = scmp.eq.s32.totalorder %s23, 1
      %p97 = por %p95, %p96
      %p98 = scmp.ne.s32.totalorder %s89, %s90
      %p99 = scmp.eq.s32.totalorder %s23, 0
      %p100 = por %p98, %p99
      %p101 = scmp.ne.s32.totalorder %s89, %s90
      %p102 = scmp.eq.s32.totalorder %s24, 1
      %p103 = por %p101, %p102
      %p105 = scmp.ne.s32.totalorder %s90, %s104
      %p106 = scmp.eq.s32.totalorder %s24, 0
      %p107 = por %p105, %p106
      %s109 = sadd.s32 %s108, 1
      %p112 = scmp.eq.s32.totalorder %s18, 1
      %p113 = scmp.ne.s32.totalorder %s108, %s110
      %p114 = scmp.eq.s32.totalorder %s18, 0
      %p115 = por %p113, %p114
      %p116 = scmp.ne.s32.totalorder %s108, %s110
      %p117 = scmp.eq.s32.totalorder %s23, 1
      %p118 = por %p116, %p117
      %p119 = scmp.ne.s32.totalorder %s110, %s111
      %p120 = scmp.eq.s32.totalorder %s23, 0
      %p121 = por %p119, %p120
      %p122 = scmp.ne.s32.totalorder %s110, %s111
      %p123 = scmp.eq.s32.totalorder %s24, 1
      %p124 = por %p122, %p123
      %p126 = scmp.ne.s32.totalorder %s111, %s125
      %p127 = scmp.eq.s32.totalorder %s24, 0
      %p128 = por %p126, %p127
      %s129 = ssub.s32 %s25, %s37
      %s130 = ssub.s32 %s26, %s33
      %s131 = sor.u32 %s129, %s130
      %p132 = scmp.eq.s32.totalorder %s131, 0
      %s134 = sadd.s32 %s133, 1
      %s135 = scalar_select %p132, %s133, %s134
      %p138 = pneg %p132
      %p139 = scmp.eq.s32.totalorder %s18, 1
      %p140 = por %p138, %p139
      %p141 = scmp.ne.s32.totalorder %s133, %s136
      %p142 = scmp.eq.s32.totalorder %s18, 0
      %p143 = por %p141, %p142
      %p144 = scmp.ne.s32.totalorder %s133, %s136
      %p145 = scmp.eq.s32.totalorder %s23, 1
      %p146 = por %p144, %p145
      %p147 = scmp.ne.s32.totalorder %s136, %s137
      %p148 = scmp.eq.s32.totalorder %s23, 0
      %p149 = por %p147, %p148
      %p150 = scmp.ne.s32.totalorder %s136, %s137
      %p151 = scmp.eq.s32.totalorder %s24, 1
      %p152 = por %p150, %p151
      %p154 = scmp.ne.s32.totalorder %s137, %s153
      %p155 = scmp.eq.s32.totalorder %s24, 0
      %p156 = por %p154, %p155
      %p157 = scmp.le.s32.totalorder 1, %s18
      %p158 = scmp.lt.s32.totalorder %s18, 3
      %p159 = pnand %p157, %p158
      %p160 = pneg %p159
      // Predicated region
      $region9: #{tpu_custom_call.1} parent=5 // pred_check
        _
      $region10: #{tpu_custom_call.1} parent=5 // pred_check_branch
        %162 = sbr.rel (%p159) target = $region12
      $region11: #{tpu_custom_call.1} parent=5 // pred_region
        %s163 = ssub.s32 %s18, 1
        // Predicated region
        $region13: #{tpu_custom_call.1} parent=11 // pred_check
          %p164 = pneg %p79
        $region14: #{tpu_custom_call.1} parent=11 // pred_check_branch
          %166 = sbr.rel (%p164) target = $region16
        $region15: #{tpu_custom_call.1} parent=11 // pred_region
          %s168 = ssub.s32 128, 128
          %169 = vsyncadd [#allocation6], %s168
          %s170 = sshll.u32 [#allocation5], 4
          %s171 = int_to_ptr.vmem [resolvable:$true] %s170
          %176 = dma.hbm_to_vmem [thread:$0]  %s1, 128, %s171, [#allocation6], 64, 64, 4
        $region16: #{tpu_custom_call.1} parent=11 // pred_fallthru
          _
        // Predicated region
        $region17: #{tpu_custom_call.1} parent=11 // pred_check
          %p177 = pneg %p100
        $region18: #{tpu_custom_call.1} parent=11 // pred_check_branch
          %179 = sbr.rel (%p177) target = $region20
        $region19: #{tpu_custom_call.1} parent=11 // pred_region
          %s181 = ssub.s32 16, 16
          %182 = vsyncadd [#allocation6], %s181
          %s184 = sshll.u32 [#allocation7], 4
          %s185 = int_to_ptr.vmem [resolvable:$true] %s184
          %187 = dma.hbm_to_vmem [thread:$0]  %s2, 16, %s185, [#allocation6]
        $region20: #{tpu_custom_call.1} parent=11 // pred_fallthru
          _
        // Predicated region
        $region21: #{tpu_custom_call.1} parent=11 // pred_check
          %p188 = pneg %p121
        $region22: #{tpu_custom_call.1} parent=11 // pred_check_branch
          %190 = sbr.rel (%p188) target = $region24
        $region23: #{tpu_custom_call.1} parent=11 // pred_region
          %s192 = ssub.s32 16, 16
          %193 = vsyncadd [#allocation9], %s192
          %s195 = sshll.u32 [#allocation8], 4
          %s196 = int_to_ptr.vmem [resolvable:$true] %s195
          %198 = dma.hbm_to_vmem [thread:$0]  %s3, 16, %s196, [#allocation9]
        $region24: #{tpu_custom_call.1} parent=11 // pred_fallthru
          _
      $region12: #{tpu_custom_call.1} parent=5 // pred_fallthru
        _
      %p199 = scmp.lt.s32.totalorder %s18, 2
      // Predicated region
      $region25: #{tpu_custom_call.1} parent=5 // pred_check
        %p200 = pneg %p199
      $region26: #{tpu_custom_call.1} parent=5 // pred_check_branch
        %202 = sbr.rel (%p200) target = $region28
      $region27: #{tpu_custom_call.1} parent=5 // pred_region
        // Predicated region
        $region29: #{tpu_custom_call.1} parent=27 // pred_check
          %p203 = pneg %p52
        $region30: #{tpu_custom_call.1} parent=27 // pred_check_branch
          %205 = sbr.rel (%p203) target = $region32
        $region31: #{tpu_custom_call.1} parent=27 // pred_region
          %s206 = sand.u32 %s42, 1
          %s207 = scalar_lea.sflag [#allocation3], %s206
          %s208 = sand.u32 %s42, 1
          %s209 = smul.addr %s208, 128
          %s210 = scalar_lea.vmem [#allocation2], %s209
          %s211 = smul.u32 32, %s26
          %s213 = ssub.s32 2048, 2048
          %214 = vsyncadd %s207, %s213
          %s215 = smul.addr %s25, 32
          %s216 = sadd.s32 %s211, %s215
          %s217 = smul.addr %s216, 64
          %s218 = scalar_lea.hbm %s0, %s217
          %s219 = sshll.u32 %s210, 4
          %s220 = int_to_ptr.vmem [resolvable:$true] %s219
          %225 = dma.hbm_to_vmem [thread:$0]  %s218, 2048, %s220, %s207, 64, 64, 4
        $region32: #{tpu_custom_call.1} parent=27 // pred_fallthru
          _
      $region28: #{tpu_custom_call.1} parent=5 // pred_fallthru
        _
      %p226 = scmp.le.s32.totalorder 1, %s18
      %p227 = scmp.lt.s32.totalorder %s18, 3
      %p228 = pnand %p226, %p227
      %p229 = pneg %p228
      // Predicated region
      $region33: #{tpu_custom_call.1} parent=5 // pred_check
        _
      $region34: #{tpu_custom_call.1} parent=5 // pred_check_branch
        %231 = sbr.rel (%p228) target = $region36
      $region35: #{tpu_custom_call.1} parent=5 // pred_region
        %s232 = ssub.s32 %s18, 1
        %s233 = sand.u32 %s45, 1
        %s234 = scalar_lea.sflag [#allocation3], %s233
        %s235 = sand.u32 %s45, 1
        %s236 = smul.addr %s235, 128
        %s237 = scalar_lea.vmem [#allocation2], %s236
        // Predicated region
        $region37: #{tpu_custom_call.1} parent=35 // pred_check
          %p238 = pneg %p58
        $region38: #{tpu_custom_call.1} parent=35 // pred_check_branch
          %240 = sbr.rel (%p238) target = $region40
        $region39: #{tpu_custom_call.1} parent=35 // pred_region
          %241 = dma.done %s234, 2048
        $region40: #{tpu_custom_call.1} parent=35 // pred_fallthru
          _
        // Predicated region
        $region41: #{tpu_custom_call.1} parent=35 // pred_check
          %p242 = pneg %p79
        $region42: #{tpu_custom_call.1} parent=35 // pred_check_branch
          %244 = sbr.rel (%p242) target = $region44
        $region43: #{tpu_custom_call.1} parent=35 // pred_region
          %245 = dma.done [#allocation6], 128
        $region44: #{tpu_custom_call.1} parent=35 // pred_fallthru
          _
        // Predicated region
        $region45: #{tpu_custom_call.1} parent=35 // pred_check
          %p246 = pneg %p100
        $region46: #{tpu_custom_call.1} parent=35 // pred_check_branch
          %248 = sbr.rel (%p246) target = $region48
        $region47: #{tpu_custom_call.1} parent=35 // pred_region
          %249 = dma.done [#allocation6], 16
        $region48: #{tpu_custom_call.1} parent=35 // pred_fallthru
          _
        // Predicated region
        $region49: #{tpu_custom_call.1} parent=35 // pred_check
          %p250 = pneg %p121
        $region50: #{tpu_custom_call.1} parent=35 // pred_check_branch
          %252 = sbr.rel (%p250) target = $region52
        $region51: #{tpu_custom_call.1} parent=35 // pred_region
          %253 = dma.done [#allocation9], 16
        $region52: #{tpu_custom_call.1} parent=35 // pred_fallthru
          _
        %s254 = sand.u32 %s45, 1
        %s255 = scalar_lea.sflag [#allocation3], %s254
        %s256 = sand.u32 %s45, 1
        %s257 = smul.addr %s256, 128
        %s258 = scalar_lea.vmem [#allocation2], %s257
        %p259 = pneg %p58
        %p260 = pneg %p55
        %p261 = pneg %p79
        %p262 = pneg %p76
        %p263 = pneg %p100
        %p264 = pneg %p97
        %p265 = pneg %p121
        %p266 = pneg %p118
        %p267 = pneg %p149
        %p268 = pneg %p146
        %s269 = sand.u32 %s136, 1
        %s270 = scalar_lea.sflag [#allocation4], %s269
        %s271 = sand.u32 %s136, 1
        %s272 = smul.addr %s271, 128
        %s273 = scalar_lea.vmem [#allocation10], %s272
        %s274 = smul.u32 32, %s28
        %s275 = smul.u32 32, %s28
        %v277 = vld [vmem:[%s237] sm:$0xf]
        %v278 = vld [vmem:[%s237 + $0x4] sm:$0xf]
        %v279 = vld [vmem:[%s237 + $0x8] sm:$0xf]
        %v280 = vld [vmem:[%s237 + $0xc] sm:$0xf]
        %v281 = vld [vmem:[%s237 + $0x10] sm:$0xf]
        %v282 = vld [vmem:[%s237 + $0x14] sm:$0xf]
        %v283 = vld [vmem:[%s237 + $0x18] sm:$0xf]
        %v284 = vld [vmem:[%s237 + $0x1c] sm:$0xf]
        %v285 = vld [vmem:[%s237 + $0x20] sm:$0xf]
        %v286 = vld [vmem:[%s237 + $0x24] sm:$0xf]
        %v287 = vld [vmem:[%s237 + $0x28] sm:$0xf]
        %v288 = vld [vmem:[%s237 + $0x2c] sm:$0xf]
        %v289 = vld [vmem:[%s237 + $0x30] sm:$0xf]
        %v290 = vld [vmem:[%s237 + $0x34] sm:$0xf]
        %v291 = vld [vmem:[%s237 + $0x38] sm:$0xf]
        %v292 = vld [vmem:[%s237 + $0x3c] sm:$0xf]
        %v293 = vld [vmem:[%s237 + $0x40] sm:$0xf]
        %v294 = vld [vmem:[%s237 + $0x44] sm:$0xf]
        %v295 = vld [vmem:[%s237 + $0x48] sm:$0xf]
        %v296 = vld [vmem:[%s237 + $0x4c] sm:$0xf]
        %v297 = vld [vmem:[%s237 + $0x50] sm:$0xf]
        %v298 = vld [vmem:[%s237 + $0x54] sm:$0xf]
        %v299 = vld [vmem:[%s237 + $0x58] sm:$0xf]
        %v300 = vld [vmem:[%s237 + $0x5c] sm:$0xf]
        %v301 = vld [vmem:[%s237 + $0x60] sm:$0xf]
        %v302 = vld [vmem:[%s237 + $0x64] sm:$0xf]
        %v303 = vld [vmem:[%s237 + $0x68] sm:$0xf]
        %v304 = vld [vmem:[%s237 + $0x6c] sm:$0xf]
        %v305 = vld [vmem:[%s237 + $0x70] sm:$0xf]
        %v306 = vld [vmem:[%s237 + $0x74] sm:$0xf]
        %v307 = vld [vmem:[%s237 + $0x78] sm:$0xf]
        %v308 = vld [vmem:[%s237 + $0x7c] sm:$0xf]
        %v309 = vld [vmem:[#allocation5] sm:$0xf]
        %v310 = vld [vmem:[#allocation5 + $0x4] sm:$0xf]
        %v343 = vunpack.c.l.b16 %v277
        %v344 = vunpack.c.l.b16 %v278
        %v345 = vunpack.c.l.b16 %v279
        %v346 = vunpack.c.l.b16 %v280
        %v347 = vunpack.c.l.b16 %v281
        %v348 = vunpack.c.l.b16 %v282
        %v349 = vunpack.c.l.b16 %v283
        %v350 = vunpack.c.l.b16 %v284
        %v351 = vunpack.c.l.b16 %v285
        %v352 = vunpack.c.l.b16 %v286
        %v353 = vunpack.c.l.b16 %v287
        %v354 = vunpack.c.l.b16 %v288
        %v355 = vunpack.c.l.b16 %v289
        %v356 = vunpack.c.l.b16 %v290
        %v357 = vunpack.c.l.b16 %v291
        %v358 = vunpack.c.l.b16 %v292
        %v359 = vunpack.c.l.b16 %v293
        %v360 = vunpack.c.l.b16 %v294
        %v361 = vunpack.c.l.b16 %v295
        %v362 = vunpack.c.l.b16 %v296
        %v363 = vunpack.c.l.b16 %v297
        %v364 = vunpack.c.l.b16 %v298
        %v365 = vunpack.c.l.b16 %v299
        %v366 = vunpack.c.l.b16 %v300
        %v367 = vunpack.c.l.b16 %v301
        %v368 = vunpack.c.l.b16 %v302
        %v369 = vunpack.c.l.b16 %v303
        %v370 = vunpack.c.l.b16 %v304
        %v371 = vunpack.c.l.b16 %v305
        %v372 = vunpack.c.l.b16 %v306
        %v373 = vunpack.c.l.b16 %v307
        %v374 = vunpack.c.l.b16 %v308
        %v375 = vpack.c.b16 %v344, %v343
        %v376 = vpack.c.b16 %v346, %v345
        %v377 = vpack.c.b16 %v348, %v347
        %v378 = vpack.c.b16 %v350, %v349
        %v379 = vpack.c.b16 %v352, %v351
        %v380 = vpack.c.b16 %v354, %v353
        %v381 = vpack.c.b16 %v356, %v355
        %v382 = vpack.c.b16 %v358, %v357
        %v383 = vpack.c.b16 %v360, %v359
        %v384 = vpack.c.b16 %v362, %v361
        %v385 = vpack.c.b16 %v364, %v363
        %v386 = vpack.c.b16 %v366, %v365
        %v387 = vpack.c.b16 %v368, %v367
        %v388 = vpack.c.b16 %v370, %v369
        %v389 = vpack.c.b16 %v372, %v371
        %v390 = vpack.c.b16 %v374, %v373
        %v393 = vunpack.c.l.b16 %v309
        %v394 = vunpack.c.l.b16 %v310
        %v395 = vpack.c.b16 %v394, %v393
        %vm397 = vcmask 130048
        %v399 = vsel %vm397, %v375, 0
        %v402 = vsel %vm397, %v376, 0
        %v405 = vsel %vm397, %v377, 0
        %v408 = vsel %vm397, %v378, 0
        %v411 = vsel %vm397, %v379, 0
        %v414 = vsel %vm397, %v380, 0
        %v417 = vsel %vm397, %v381, 0
        %v420 = vsel %vm397, %v382, 0
        %v423 = vsel %vm397, %v383, 0
        %v426 = vsel %vm397, %v384, 0
        %v429 = vsel %vm397, %v385, 0
        %v432 = vsel %vm397, %v386, 0
        %v435 = vsel %vm397, %v387, 0
        %v438 = vsel %vm397, %v388, 0
        %v441 = vsel %vm397, %v389, 0
        %v444 = vsel %vm397, %v390, 0
        %446 = vmatprep.subr.bf16.mxu0 0
        %447 = vmatpush1.bf16.msra.mxu0 %v395
        %448 = vmatprep.subr.bf16.mxu0 0
        %449 = vmatpush1.bf16.msra.mxu0 0
        %450 = vmatprep.subr.bf16.mxu0 0
        %451 = vmatpush1.bf16.msra.mxu0 0
        %452 = vmatprep.subr.bf16.mxu0 0
        %453 = vmatpush1.bf16.msra.mxu0 0
        %454 = vmatprep.subr.bf16.mxu0 0
        %455 = vmatpush1.bf16.msra.mxu0 0
        %456 = vmatprep.subr.bf16.mxu0 0
        %457 = vmatpush1.bf16.msra.mxu0 0
        %458 = vmatprep.subr.bf16.mxu0 0
        %459 = vmatpush1.bf16.msra.mxu0 0
        %460 = vmatprep.subr.bf16.mxu0 0
        %461 = vmatpush1.bf16.msra.mxu0 0
        %462 = vmatprep.subr.bf16.mxu0 0
        %463 = vmatpush1.bf16.msra.mxu0 0
        %464 = vmatprep.subr.bf16.mxu0 0
        %465 = vmatpush1.bf16.msra.mxu0 0
        %466 = vmatprep.subr.bf16.mxu0 0
        %467 = vmatpush1.bf16.msra.mxu0 0
        %468 = vmatprep.subr.bf16.mxu0 0
        %469 = vmatpush1.bf16.msra.mxu0 0
        %470 = vmatprep.subr.bf16.mxu0 0
        %471 = vmatpush1.bf16.msra.mxu0 0
        %472 = vmatprep.subr.bf16.mxu0 0
        %473 = vmatpush1.bf16.msra.mxu0 0
        %474 = vmatprep.subr.bf16.mxu0 0
        %475 = vmatpush1.bf16.msra.mxu0 0
        %476 = vmatprep.subr.bf16.mxu0 0
        %477 = vmatpush1.bf16.msra.mxu0 0
        %478 = vmatprep.mubr.bf16.mxu0 0
        %479 = vmatmul.mubr.bf16.gmra.mrb[0].mxu0 %v399
        %v480 = vpop.f32.mrb[0].mxu0
        %v481 = vadd.f32 0.0, %v480
        %v482 = vpop.f32.mrb[0].mxu0
        %v483 = vpop.f32.mrb[0].mxu0
        %v484 = vadd.f32 0.0, %v483
        %v485 = vpop.f32.mrb[0].mxu0
        %486 = vmatprep.mubr.bf16.mxu0 0
        %487 = vmatmul.mubr.bf16.gmra.mrb[0].mxu0 %v402
        %v488 = vpop.f32.mrb[0].mxu0
        %v489 = vadd.f32 0.0, %v488
        %v490 = vpop.f32.mrb[0].mxu0
        %v491 = vpop.f32.mrb[0].mxu0
        %v492 = vadd.f32 0.0, %v491
        %v493 = vpop.f32.mrb[0].mxu0
        %494 = vmatprep.mubr.bf16.mxu0 0
        %495 = vmatmul.mubr.bf16.gmra.mrb[0].mxu0 %v405
        %v496 = vpop.f32.mrb[0].mxu0
        %v497 = vadd.f32 0.0, %v496
        %v498 = vpop.f32.mrb[0].mxu0
        %v499 = vpop.f32.mrb[0].mxu0
        %v500 = vadd.f32 0.0, %v499
        %v501 = vpop.f32.mrb[0].mxu0
        %502 = vmatprep.mubr.bf16.mxu0 0
        %503 = vmatmul.mubr.bf16.gmra.mrb[0].mxu0 %v408
        %v504 = vpop.f32.mrb[0].mxu0
        %v505 = vadd.f32 0.0, %v504
        %v506 = vpop.f32.mrb[0].mxu0
        %v507 = vpop.f32.mrb[0].mxu0
        %v508 = vadd.f32 0.0, %v507
        %v509 = vpop.f32.mrb[0].mxu0
        %510 = vmatprep.mubr.bf16.mxu0 0
        %511 = vmatmul.mubr.bf16.gmra.mrb[0].mxu0 %v411
        %v512 = vpop.f32.mrb[0].mxu0
        %v513 = vadd.f32 0.0, %v512
        %v514 = vpop.f32.mrb[0].mxu0
        %v515 = vpop.f32.mrb[0].mxu0
        %v516 = vadd.f32 0.0, %v515
        %v517 = vpop.f32.mrb[0].mxu0
        %518 = vmatprep.mubr.bf16.mxu0 0
        %519 = vmatmul.mubr.bf16.gmra.mrb[0].mxu0 %v414
        %v520 = vpop.f32.mrb[0].mxu0
        %v521 = vadd.f32 0.0, %v520
        %v522 = vpop.f32.mrb[0].mxu0
        %v523 = vpop.f32.mrb[0].mxu0
        %v524 = vadd.f32 0.0, %v523
        %v525 = vpop.f32.mrb[0].mxu0
        %526 = vmatprep.mubr.bf16.mxu0 0
        %527 = vmatmul.mubr.bf16.gmra.mrb[0].mxu0 %v417
        %v528 = vpop.f32.mrb[0].mxu0
        %v529 = vadd.f32 0.0, %v528
        %v530 = vpop.f32.mrb[0].mxu0
        %v531 = vpop.f32.mrb[0].mxu0
        %v532 = vadd.f32 0.0, %v531
        %v533 = vpop.f32.mrb[0].mxu0
        %534 = vmatprep.mubr.bf16.mxu0 0
        %535 = vmatmul.mubr.bf16.gmra.mrb[0].mxu0 %v420
        %v536 = vpop.f32.mrb[0].mxu0
        %v537 = vadd.f32 0.0, %v536
        %v538 = vpop.f32.mrb[0].mxu0
        %v539 = vpop.f32.mrb[0].mxu0
        %v540 = vadd.f32 0.0, %v539
        %v541 = vpop.f32.mrb[0].mxu0
        %542 = vmatprep.mubr.bf16.mxu0 0
        %543 = vmatmul.mubr.bf16.gmra.mrb[0].mxu0 %v423
        %v544 = vpop.f32.mrb[0].mxu0
        %v545 = vadd.f32 0.0, %v544
        %v546 = vpop.f32.mrb[0].mxu0
        %v547 = vpop.f32.mrb[0].mxu0
        %v548 = vadd.f32 0.0, %v547
        %v549 = vpop.f32.mrb[0].mxu0
        %550 = vmatprep.mubr.bf16.mxu0 0
        %551 = vmatmul.mubr.bf16.gmra.mrb[0].mxu0 %v426
        %v552 = vpop.f32.mrb[0].mxu0
        %v553 = vadd.f32 0.0, %v552
        %v554 = vpop.f32.mrb[0].mxu0
        %v555 = vpop.f32.mrb[0].mxu0
        %v556 = vadd.f32 0.0, %v555
        %v557 = vpop.f32.mrb[0].mxu0
        %558 = vmatprep.mubr.bf16.mxu0 0
        %559 = vmatmul.mubr.bf16.gmra.mrb[0].mxu0 %v429
        %v560 = vpop.f32.mrb[0].mxu0
        %v561 = vadd.f32 0.0, %v560
        %v562 = vpop.f32.mrb[0].mxu0
        %v563 = vpop.f32.mrb[0].mxu0
        %v564 = vadd.f32 0.0, %v563
        %v565 = vpop.f32.mrb[0].mxu0
        %566 = vmatprep.mubr.bf16.mxu0 0
        %567 = vmatmul.mubr.bf16.gmra.mrb[0].mxu0 %v432
        %v568 = vpop.f32.mrb[0].mxu0
        %v569 = vadd.f32 0.0, %v568
        %v570 = vpop.f32.mrb[0].mxu0
        %v571 = vpop.f32.mrb[0].mxu0
        %v572 = vadd.f32 0.0, %v571
        %v573 = vpop.f32.mrb[0].mxu0
        %574 = vmatprep.mubr.bf16.mxu0 0
        %575 = vmatmul.mubr.bf16.gmra.mrb[0].mxu0 %v435
        %v576 = vpop.f32.mrb[0].mxu0
        %v577 = vadd.f32 0.0, %v576
        %v578 = vpop.f32.mrb[0].mxu0
        %v579 = vpop.f32.mrb[0].mxu0
        %v580 = vadd.f32 0.0, %v579
        %v581 = vpop.f32.mrb[0].mxu0
        %582 = vmatprep.mubr.bf16.mxu0 0
        %583 = vmatmul.mubr.bf16.gmra.mrb[0].mxu0 %v438
        %v584 = vpop.f32.mrb[0].mxu0
        %v585 = vadd.f32 0.0, %v584
        %v586 = vpop.f32.mrb[0].mxu0
        %v587 = vpop.f32.mrb[0].mxu0
        %v588 = vadd.f32 0.0, %v587
        %v589 = vpop.f32.mrb[0].mxu0
        %590 = vmatprep.mubr.bf16.mxu0 0
        %591 = vmatmul.mubr.bf16.gmra.mrb[0].mxu0 %v441
        %v592 = vpop.f32.mrb[0].mxu0
        %v593 = vadd.f32 0.0, %v592
        %v594 = vpop.f32.mrb[0].mxu0
        %v595 = vpop.f32.mrb[0].mxu0
        %v596 = vadd.f32 0.0, %v595
        %v597 = vpop.f32.mrb[0].mxu0
        %598 = vmatprep.mubr.bf16.mxu0 0
        %599 = vmatmul.mubr.bf16.gmra.mrb[0].mxu0 %v444
        %v600 = vpop.f32.mrb[0].mxu0
        %v601 = vadd.f32 0.0, %v600
        %v602 = vpop.f32.mrb[0].mxu0
        %v603 = vpop.f32.mrb[0].mxu0
        %v604 = vadd.f32 0.0, %v603
        %v605 = vpop.f32.mrb[0].mxu0
        %606 = vdwg.mxu0
        %v607 = vld [vmem:[#allocation7] sm:$0x1]
        %v609 = vlaneseq
        %v610 = vshrl.u32 %v609, 7
        %v611 = vsub.s32 0, %v610
        %v612 = vrot.slane %v607, %v611
        %v614 = vmul.f32 %v481, %v612
        %v615 = vmul.f32 %v484, %v612
        %v616 = vmul.f32 %v489, %v612
        %v617 = vmul.f32 %v492, %v612
        %v618 = vmul.f32 %v497, %v612
        %v619 = vmul.f32 %v500, %v612
        %v620 = vmul.f32 %v505, %v612
        %v621 = vmul.f32 %v508, %v612
        %v622 = vmul.f32 %v513, %v612
        %v623 = vmul.f32 %v516, %v612
        %v624 = vmul.f32 %v521, %v612
        %v625 = vmul.f32 %v524, %v612
        %v626 = vmul.f32 %v529, %v612
        %v627 = vmul.f32 %v532, %v612
        %v628 = vmul.f32 %v537, %v612
        %v629 = vmul.f32 %v540, %v612
        %v630 = vmul.f32 %v545, %v612
        %v631 = vmul.f32 %v548, %v612
        %v632 = vmul.f32 %v553, %v612
        %v633 = vmul.f32 %v556, %v612
        %v634 = vmul.f32 %v561, %v612
        %v635 = vmul.f32 %v564, %v612
        %v636 = vmul.f32 %v569, %v612
        %v637 = vmul.f32 %v572, %v612
        %v638 = vmul.f32 %v577, %v612
        %v639 = vmul.f32 %v580, %v612
        %v640 = vmul.f32 %v585, %v612
        %v641 = vmul.f32 %v588, %v612
        %v642 = vmul.f32 %v593, %v612
        %v643 = vmul.f32 %v596, %v612
        %v644 = vmul.f32 %v601, %v612
        %v645 = vmul.f32 %v604, %v612
        %v646 = vld [vmem:[#allocation8] sm:$0x1]
        %v648 = vlaneseq
        %v649 = vshrl.u32 %v648, 7
        %v650 = vsub.s32 0, %v649
        %v651 = vrot.slane %v646, %v650
        %v653 = vadd.f32 %v614, %v651
        %v654 = vadd.f32 %v615, %v651
        %v655 = vadd.f32 %v616, %v651
        %v656 = vadd.f32 %v617, %v651
        %v657 = vadd.f32 %v618, %v651
        %v658 = vadd.f32 %v619, %v651
        %v659 = vadd.f32 %v620, %v651
        %v660 = vadd.f32 %v621, %v651
        %v661 = vadd.f32 %v622, %v651
        %v662 = vadd.f32 %v623, %v651
        %v663 = vadd.f32 %v624, %v651
        %v664 = vadd.f32 %v625, %v651
        %v665 = vadd.f32 %v626, %v651
        %v666 = vadd.f32 %v627, %v651
        %v667 = vadd.f32 %v628, %v651
        %v668 = vadd.f32 %v629, %v651
        %v669 = vadd.f32 %v630, %v651
        %v670 = vadd.f32 %v631, %v651
        %v671 = vadd.f32 %v632, %v651
        %v672 = vadd.f32 %v633, %v651
        %v673 = vadd.f32 %v634, %v651
        %v674 = vadd.f32 %v635, %v651
        %v675 = vadd.f32 %v636, %v651
        %v676 = vadd.f32 %v637, %v651
        %v677 = vadd.f32 %v638, %v651
        %v678 = vadd.f32 %v639, %v651
        %v679 = vadd.f32 %v640, %v651
        %v680 = vadd.f32 %v641, %v651
        %v681 = vadd.f32 %v642, %v651
        %v682 = vadd.f32 %v643, %v651
        %v683 = vadd.f32 %v644, %v651
        %v684 = vadd.f32 %v645, %v651
        %v685 = vmax.f32 %v653, 0.0
        %v686 = vmax.f32 %v654, 0.0
        %v687 = vmax.f32 %v655, 0.0
        %v688 = vmax.f32 %v656, 0.0
        %v689 = vmax.f32 %v657, 0.0
        %v690 = vmax.f32 %v658, 0.0
        %v691 = vmax.f32 %v659, 0.0
        %v692 = vmax.f32 %v660, 0.0
        %v693 = vmax.f32 %v661, 0.0
        %v694 = vmax.f32 %v662, 0.0
        %v695 = vmax.f32 %v663, 0.0
        %v696 = vmax.f32 %v664, 0.0
        %v697 = vmax.f32 %v665, 0.0
        %v698 = vmax.f32 %v666, 0.0
        %v699 = vmax.f32 %v667, 0.0
        %v700 = vmax.f32 %v668, 0.0
        %v701 = vmax.f32 %v669, 0.0
        %v702 = vmax.f32 %v670, 0.0
        %v703 = vmax.f32 %v671, 0.0
        %v704 = vmax.f32 %v672, 0.0
        %v705 = vmax.f32 %v673, 0.0
        %v706 = vmax.f32 %v674, 0.0
        %v707 = vmax.f32 %v675, 0.0
        %v708 = vmax.f32 %v676, 0.0
        %v709 = vmax.f32 %v677, 0.0
        %v710 = vmax.f32 %v678, 0.0
        %v711 = vmax.f32 %v679, 0.0
        %v712 = vmax.f32 %v680, 0.0
        %v713 = vmax.f32 %v681, 0.0
        %v714 = vmax.f32 %v682, 0.0
        %v715 = vmax.f32 %v683, 0.0
        %v716 = vmax.f32 %v684, 0.0
        %v717 = vpack.c.bf16 %v686, %v685
        %v718 = vpack.c.bf16 %v688, %v687
        %v719 = vpack.c.bf16 %v690, %v689
        %v720 = vpack.c.bf16 %v692, %v691
        %v721 = vpack.c.bf16 %v694, %v693
        %v722 = vpack.c.bf16 %v696, %v695
        %v723 = vpack.c.bf16 %v698, %v697
        %v724 = vpack.c.bf16 %v700, %v699
        %v725 = vpack.c.bf16 %v702, %v701
        %v726 = vpack.c.bf16 %v704, %v703
        %v727 = vpack.c.bf16 %v706, %v705
        %v728 = vpack.c.bf16 %v708, %v707
        %v729 = vpack.c.bf16 %v710, %v709
        %v730 = vpack.c.bf16 %v712, %v711
        %v731 = vpack.c.bf16 %v714, %v713
        %v732 = vpack.c.bf16 %v716, %v715
        %v749 = vunpack.c.l.b16 %v717
        %v750 = vunpack.c.h.b16 %v717
        %v751 = vunpack.c.l.b16 %v718
        %v752 = vunpack.c.h.b16 %v718
        %v753 = vunpack.c.l.b16 %v719
        %v754 = vunpack.c.h.b16 %v719
        %v755 = vunpack.c.l.b16 %v720
        %v756 = vunpack.c.h.b16 %v720
        %v757 = vunpack.c.l.b16 %v721
        %v758 = vunpack.c.h.b16 %v721
        %v759 = vunpack.c.l.b16 %v722
        %v760 = vunpack.c.h.b16 %v722
        %v761 = vunpack.c.l.b16 %v723
        %v762 = vunpack.c.h.b16 %v723
        %v763 = vunpack.c.l.b16 %v724
        %v764 = vunpack.c.h.b16 %v724
        %v765 = vunpack.c.l.b16 %v725
        %v766 = vunpack.c.h.b16 %v725
        %v767 = vunpack.c.l.b16 %v726
        %v768 = vunpack.c.h.b16 %v726
        %v769 = vunpack.c.l.b16 %v727
        %v770 = vunpack.c.h.b16 %v727
        %v771 = vunpack.c.l.b16 %v728
        %v772 = vunpack.c.h.b16 %v728
        %v773 = vunpack.c.l.b16 %v729
        %v774 = vunpack.c.h.b16 %v729
        %v775 = vunpack.c.l.b16 %v730
        %v776 = vunpack.c.h.b16 %v730
        %v777 = vunpack.c.l.b16 %v731
        %v778 = vunpack.c.h.b16 %v731
        %v779 = vunpack.c.l.b16 %v732
        %v780 = vunpack.c.h.b16 %v732
        %v781 = vpack.c.b16 %v749, %v749
        %v782 = vpack.c.b16 %v750, %v750
        %v783 = vpack.c.b16 %v751, %v751
        %v784 = vpack.c.b16 %v752, %v752
        %v785 = vpack.c.b16 %v753, %v753
        %v786 = vpack.c.b16 %v754, %v754
        %v787 = vpack.c.b16 %v755, %v755
        %v788 = vpack.c.b16 %v756, %v756
        %v789 = vpack.c.b16 %v757, %v757
        %v790 = vpack.c.b16 %v758, %v758
        %v791 = vpack.c.b16 %v759, %v759
        %v792 = vpack.c.b16 %v760, %v760
        %v793 = vpack.c.b16 %v761, %v761
        %v794 = vpack.c.b16 %v762, %v762
        %v795 = vpack.c.b16 %v763, %v763
        %v796 = vpack.c.b16 %v764, %v764
        %v797 = vpack.c.b16 %v765, %v765
        %v798 = vpack.c.b16 %v766, %v766
        %v799 = vpack.c.b16 %v767, %v767
        %v800 = vpack.c.b16 %v768, %v768
        %v801 = vpack.c.b16 %v769, %v769
        %v802 = vpack.c.b16 %v770, %v770
        %v803 = vpack.c.b16 %v771, %v771
        %v804 = vpack.c.b16 %v772, %v772
        %v805 = vpack.c.b16 %v773, %v773
        %v806 = vpack.c.b16 %v774, %v774
        %v807 = vpack.c.b16 %v775, %v775
        %v808 = vpack.c.b16 %v776, %v776
        %v809 = vpack.c.b16 %v777, %v777
        %v810 = vpack.c.b16 %v778, %v778
        %v811 = vpack.c.b16 %v779, %v779
        %v812 = vpack.c.b16 %v780, %v780
        %vm845 = vcmask 60416
        %846 = vst.msk [vmem:[%s273] sm:$0xf] %vm845, %v781
        %847 = vst.msk [vmem:[%s273 + $0x4] sm:$0xf] %vm845, %v782
        %848 = vst.msk [vmem:[%s273 + $0x8] sm:$0xf] %vm845, %v783
        %849 = vst.msk [vmem:[%s273 + $0xc] sm:$0xf] %vm845, %v784
        %850 = vst.msk [vmem:[%s273 + $0x10] sm:$0xf] %vm845, %v785
        %851 = vst.msk [vmem:[%s273 + $0x14] sm:$0xf] %vm845, %v786
        %852 = vst.msk [vmem:[%s273 + $0x18] sm:$0xf] %vm845, %v787
        %853 = vst.msk [vmem:[%s273 + $0x1c] sm:$0xf] %vm845, %v788
        %854 = vst.msk [vmem:[%s273 + $0x20] sm:$0xf] %vm845, %v789
        %855 = vst.msk [vmem:[%s273 + $0x24] sm:$0xf] %vm845, %v790
        %856 = vst.msk [vmem:[%s273 + $0x28] sm:$0xf] %vm845, %v791
        %857 = vst.msk [vmem:[%s273 + $0x2c] sm:$0xf] %vm845, %v792
        %858 = vst.msk [vmem:[%s273 + $0x30] sm:$0xf] %vm845, %v793
        %859 = vst.msk [vmem:[%s273 + $0x34] sm:$0xf] %vm845, %v794
        %860 = vst.msk [vmem:[%s273 + $0x38] sm:$0xf] %vm845, %v795
        %861 = vst.msk [vmem:[%s273 + $0x3c] sm:$0xf] %vm845, %v796
        %862 = vst.msk [vmem:[%s273 + $0x40] sm:$0xf] %vm845, %v797
        %863 = vst.msk [vmem:[%s273 + $0x44] sm:$0xf] %vm845, %v798
        %864 = vst.msk [vmem:[%s273 + $0x48] sm:$0xf] %vm845, %v799
        %865 = vst.msk [vmem:[%s273 + $0x4c] sm:$0xf] %vm845, %v800
        %866 = vst.msk [vmem:[%s273 + $0x50] sm:$0xf] %vm845, %v801
        %867 = vst.msk [vmem:[%s273 + $0x54] sm:$0xf] %vm845, %v802
        %868 = vst.msk [vmem:[%s273 + $0x58] sm:$0xf] %vm845, %v803
        %869 = vst.msk [vmem:[%s273 + $0x5c] sm:$0xf] %vm845, %v804
        %870 = vst.msk [vmem:[%s273 + $0x60] sm:$0xf] %vm845, %v805
        %871 = vst.msk [vmem:[%s273 + $0x64] sm:$0xf] %vm845, %v806
        %872 = vst.msk [vmem:[%s273 + $0x68] sm:$0xf] %vm845, %v807
        %873 = vst.msk [vmem:[%s273 + $0x6c] sm:$0xf] %vm845, %v808
        %874 = vst.msk [vmem:[%s273 + $0x70] sm:$0xf] %vm845, %v809
        %875 = vst.msk [vmem:[%s273 + $0x74] sm:$0xf] %vm845, %v810
        %876 = vst.msk [vmem:[%s273 + $0x78] sm:$0xf] %vm845, %v811
        %877 = vst.msk [vmem:[%s273 + $0x7c] sm:$0xf] %vm845, %v812
        %s878 = sand.u32 %s136, 1
        %s879 = scalar_lea.sflag [#allocation4], %s878
        %s880 = sand.u32 %s136, 1
        %s881 = smul.addr %s880, 128
        %s882 = scalar_lea.vmem [#allocation10], %s881
        // Predicated region
        $region53: #{tpu_custom_call.1} parent=35 // pred_check
          %p883 = pneg %p146
        $region54: #{tpu_custom_call.1} parent=35 // pred_check_branch
          %885 = sbr.rel (%p883) target = $region56
        $region55: #{tpu_custom_call.1} parent=35 // pred_region
          %s886 = smul.u32 32, %s28
          %s888 = ssub.s32 2048, 2048
          %889 = vsyncadd %s879, %s888
          %s890 = smul.addr %s27, 32
          %s891 = sadd.s32 %s886, %s890
          %s892 = smul.addr %s891, 64
          %s893 = scalar_lea.hbm %s4, %s892
          %s894 = sshll.u32 %s882, 4
          %s895 = int_to_ptr.vmem [resolvable:$true] %s894
          %900 = dma.vmem_to_hbm [thread:$0]  %s895, 2048, %s893, %s879, 64, 64, 4
        $region56: #{tpu_custom_call.1} parent=35 // pred_fallthru
          _
      $region36: #{tpu_custom_call.1} parent=5 // pred_fallthru
        _
      %p901 = scmp.le.s32.totalorder 2, %s18
      // Predicated region
      $region57: #{tpu_custom_call.1} parent=5 // pred_check
        %p902 = pneg %p901
      $region58: #{tpu_custom_call.1} parent=5 // pred_check_branch
        %904 = sbr.rel (%p902) target = $region60
      $region59: #{tpu_custom_call.1} parent=5 // pred_region
        %s905 = ssub.s32 %s18, 2
        // Predicated region
        $region61: #{tpu_custom_call.1} parent=59 // pred_check
          %p906 = pneg %p152
        $region62: #{tpu_custom_call.1} parent=59 // pred_check_branch
          %908 = sbr.rel (%p906) target = $region64
        $region63: #{tpu_custom_call.1} parent=59 // pred_region
          %s909 = sand.u32 %s137, 1
          %s910 = scalar_lea.sflag [#allocation4], %s909
          %s911 = sand.u32 %s137, 1
          %s912 = smul.addr %s911, 128
          %s913 = scalar_lea.vmem [#allocation10], %s912
          %914 = dma.done %s910, 2048
        $region64: #{tpu_custom_call.1} parent=59 // pred_fallthru
          _
      $region60: #{tpu_custom_call.1} parent=5 // pred_fallthru
        _
    $region6: #{tpu_custom_call.1} parent=1 // loop_footer
      %s22 = sadd.s32 1, %s18
    $region7: #{tpu_custom_call.1} parent=1 // loop_footer_branch
      %17 = sbr.rel target = $region3
    $region8: #{tpu_custom_call.1} parent=1 // loop_exit
      _
    %915 = vsyncpa [#allocation3], 1
    %s916 = scalar_lea.sflag [#allocation3], 1
    %917 = vsyncpa %s916, 1
    %918 = vsyncpa [#allocation6], 1
    %919 = vsyncpa [#allocation9], 1
    %920 = vsyncpa [#allocation4], 1
    %s921 = scalar_lea.sflag [#allocation4], 1
    %922 = vsyncpa %s921, 1

</llo_original>
